<compile_context>
chip_gen: v7x
topology: tpu7x:2x2x1
jax: 0.10.0
libtpu: 0.0.40
codegen_flags: <defaults>
</compile_context>

<pallas_src>
import functools

import jax
import jax.numpy as jnp
from jax.experimental import pallas as pl
from jax.experimental.pallas import tpu as pltpu


def _round_up(n: int, m: int) -> int:
    return ((n + m - 1) // m) * m


def _buffered_supported() -> bool:
    """Probe pipeline_mode=pl.Buffered support at BlockSpec construction time."""
    try:
        pl.BlockSpec((8, 128), lambda i: (0, 0), pipeline_mode=pl.Buffered(1))
        return True
    except Exception:
        return False


def _vmem_capacity_bytes() -> int:
    try:
        return int(pltpu.get_tpu_info().vmem_capacity_bytes)
    except Exception:
        return 64 * 1024 * 1024  # v7x-sized conservative fallback


def _weight_bytes(D: int, Dep: int, K: int, single_buf: bool) -> int:
    per_buf = (D * Dep * 2      # expand W^T   (bf16)
               + Dep * 4        # expand bias  (f32)
               + K * Dep * 4    # conv weight  (f32)
               + Dep * 4        # conv bias    (f32)
               + Dep * D * 2    # compress W^T (bf16)
               + D * 4)         # compress bias(f32)
    return per_buf * (1 if single_buf else 2)


def _step_bytes(TL: int, D: int, Dep: int, K: int,
                x_itemsize: int, o_itemsize: int, weight_bytes: int) -> int:
    hp = _round_up(max(K - 1, 1), 8)
    tiles = 2 * TL * D * x_itemsize + 2 * TL * D * o_itemsize   # double-buffered in/out tiles
    scratch = (hp + TL) * Dep * 4 if K > 1 else 8 * 128 * 4     # h staging / carry buffer (f32)
    temps = 3 * TL * Dep * 4                                    # h / acc / tap temporaries (f32)
    return tiles + scratch + temps + weight_bytes


def _pick_seq_tile(L: int, D: int, Dep: int, K: int,
                   x_itemsize: int, o_itemsize: int,
                   weight_bytes: int, vmem_budget: int) -> int:
    # Largest sublane-aligned tile that divides L and fits the VMEM budget.
    for tl in (1024, 512, 256, 128, 64, 32, 16, 8):
        if L % tl == 0 and _step_bytes(tl, D, Dep, K, x_itemsize, o_itemsize,
                                       weight_bytes) <= vmem_budget:
            return tl
    return L  # last resort: full sequence as one block (legal: equals array dim)


def _short_conv_kernel(x_ref, we_ref, be_ref, wconv_ref, bconv_ref, wc_ref, bc_ref,
                       o_ref, hbuf_ref, *, kernel_size: int, seq_tile: int, hist_pad: int):
    """One (batch, sequence-tile) block per grid step.

    x_ref:     (1, TL, D)        input tile (native dtype, cast to bf16 in-kernel)
    we_ref:    (D, Dep)          bf16 expand weight (transposed)
    be_ref:    (1, Dep)          f32 expand bias
    wconv_ref: (K, Dep)          f32 depthwise conv weight, tap-major
    bconv_ref: (1, Dep)          f32 conv bias
    wc_ref:    (Dep, D)          bf16 compress weight (transposed)
    bc_ref:    (1, D)            f32 compress bias
    o_ref:     (1, TL, D)        output tile
    hbuf_ref:  (HP + TL, Dep)    f32 staging buffer; rows [HP-(K-1):HP] carry the
                                 last K-1 rows of h from the previous tile.
    """
    K = kernel_size
    TL = seq_tile
    HP = hist_pad
    l = pl.program_id(1)

    if K > 1:
        @pl.when(l == 0)
        def _():
            # Start of a batch element's sequence: causal left-padding is zeros.
            hbuf_ref[0:HP, :] = jnp.zeros((HP, hbuf_ref.shape[1]), hbuf_ref.dtype)

    # expand: bf16 x bf16 -> f32 accumulation on the MXU
    xb = x_ref[0].astype(jnp.bfloat16)                              # (TL, D)
    h = jnp.dot(xb, we_ref[...], preferred_element_type=jnp.float32)
    h = h + be_ref[...]                                             # (TL, Dep) f32

    wconv = wconv_ref[...]                                          # (K, Dep) f32
    # zero-shift tap + conv bias (f32 VPU math, exact)
    acc = h * wconv[K - 1:K, :] + bconv_ref[...]
    if K > 1:
        # Stage h after the carried history rows so every past tap is a plain
        # static slice of one buffer (no per-step concatenate copy).
        hbuf_ref[HP:HP + TL, :] = h
        for j in range(K - 1):                                      # static unroll, small K
            s = HP - (K - 1) + j
            acc = acc + hbuf_ref[s:s + TL, :] * wconv[j:j + 1, :]
        # carry the last K-1 rows of h for the next sequence tile of this batch
        hbuf_ref[HP - (K - 1):HP, :] = h[TL - (K - 1):, :]

    # compress: bf16 x bf16 -> f32 on the MXU
    y = jnp.dot(acc.astype(wc_ref.dtype), wc_ref[...],
                preferred_element_type=jnp.float32)
    o_ref[0] = (y + bc_ref[...]).astype(o_ref.dtype)


def short_convolution(x, params, kernel_size: int, *, seq_tile: int | None = None,
                      out_dtype=None):
    """x: (B, L, D). params: dict of pre-transposed f32 weights.

    out_dtype defaults to x.dtype (module semantics); pass jnp.bfloat16 to halve
    the HBM writeback if downstream consumers accept it.
    """
    B, L, D = x.shape
    De = params["we"].shape[1]
    K = kernel_size
    Dep = _round_up(De, 128)
    out_dtype = x.dtype if out_dtype is None else out_dtype

    single_buf = _buffered_supported()
    wbytes = _weight_bytes(D, Dep, K, single_buf)
    x_itemsize = jnp.dtype(x.dtype).itemsize
    o_itemsize = jnp.dtype(out_dtype).itemsize

    vmem_cap = _vmem_capacity_bytes()
    if seq_tile is None:
        TL = _pick_seq_tile(L, D, Dep, K, x_itemsize, o_itemsize, wbytes,
                            vmem_budget=int(vmem_cap * 0.6))
    else:
        TL = seq_tile
    assert L % TL == 0, "sequence tile must divide L"
    assert TL % 8 == 0 or TL == L, "sequence tile must be sublane (8) aligned or equal L"
    assert TL >= K - 1, "sequence tile must cover the causal halo (K-1 rows)"

    HP = _round_up(max(K - 1, 1), 8)

    # Weights are tiny: pad the expanded-channel axis once to a lane multiple
    # (padded channels stay exactly zero through expand/conv and contribute
    # zero to compress) and cast the matmul operands to bf16.  x and the output
    # keep their native dtype/shape, so no extra HBM passes are added.
    we = jnp.pad(params["we"], ((0, 0), (0, Dep - De))).astype(jnp.bfloat16)
    be = jnp.pad(params["be"], ((0, 0), (0, Dep - De))).astype(jnp.float32)
    wconv = jnp.pad(params["wconv"], ((0, 0), (0, Dep - De))).astype(jnp.float32)
    bconv = jnp.pad(params["bconv"], ((0, 0), (0, Dep - De))).astype(jnp.float32)
    wc = jnp.pad(params["wc"], ((0, Dep - De), (0, 0))).astype(jnp.bfloat16)
    bc = params["bc"].astype(jnp.float32)

    kernel = functools.partial(_short_conv_kernel, kernel_size=K, seq_tile=TL, hist_pad=HP)

    # Computed VMEM budget (working set * 1.5 + margin, clamped to 90% of physical).
    step_bytes = _step_bytes(TL, D, Dep, K, x_itemsize, o_itemsize, wbytes)
    vmem_limit = min(int(vmem_cap * 0.9),
                     max(32 * 1024 * 1024, int(step_bytes * 1.5) + (4 << 20)))

    # Advisory cost estimate: expand + compress matmuls + K-tap depthwise conv.
    flops = 4 * B * L * D * De + 2 * B * L * De * K
    weight_nbytes = sum(int(a.size) * a.dtype.itemsize
                        for a in (we, be, wconv, bconv, wc, bc))
    bytes_accessed = B * L * D * (x_itemsize + o_itemsize) + weight_nbytes
    cost = pl.CostEstimate(flops=flops, transcendentals=0, bytes_accessed=bytes_accessed)

    def const_spec(shape):
        idx = lambda b, l: (0,) * len(shape)
        if single_buf:
            # Constant index_map -> one buffer is enough; halves weight VMEM.
            return pl.BlockSpec(shape, idx, pipeline_mode=pl.Buffered(1))
        return pl.BlockSpec(shape, idx)

    scratch = (pltpu.VMEM((HP + TL, Dep), jnp.float32) if K > 1
               else pltpu.VMEM((8, 128), jnp.float32))

    out = pl.pallas_call(
        kernel,
        out_shape=jax.ShapeDtypeStruct((B, L, D), out_dtype),
        grid_spec=pltpu.PrefetchScalarGridSpec(
            num_scalar_prefetch=0,
            grid=(B, L // TL),
            in_specs=[
                pl.BlockSpec((1, TL, D), lambda b, l: (b, l, 0)),    # x tile
                const_spec((D, Dep)),                                # expand W^T
                const_spec((1, Dep)),                                # expand bias
                const_spec((K, Dep)),                                # conv weight (K, C)
                const_spec((1, Dep)),                                # conv bias
                const_spec((Dep, D)),                                # compress W^T
                const_spec((1, D)),                                  # compress bias
            ],
            out_specs=pl.BlockSpec((1, TL, D), lambda b, l: (b, l, 0)),
            scratch_shapes=[scratch],
        ),
        compiler_params=pltpu.CompilerParams(
            dimension_semantics=("parallel", "arbitrary"),
            vmem_limit_bytes=vmem_limit),
        cost_estimate=cost,
    )(x, we, be, wconv, bconv, wc, bc)

    return out


def reference_forward(x, params, kernel_size: int):
    """Pure-JAX f32 reference mirroring the PyTorch module (causal=True)."""
    B, L, D = x.shape
    K = kernel_size
    h = x @ params["we"] + params["be"]                    # (B, L, De)
    hp = jnp.pad(h, ((0, 0), (K - 1, 0), (0, 0)))          # left-pad time by K-1
    y = jnp.zeros_like(h)
    for j in range(K):
        y = y + hp[:, j:j + L, :] * params["wconv"][j][None, None, :]
    y = y + params["bconv"]
    return y @ params["wc"] + params["bc"]                 # (B, L, D)


if __name__ == "__main__":
    # Small, module-consistent shapes: batch=2, seq=16, d_model=32, kernel_size=3, expand_dim=2.
    B, L, D = 2, 16, 32
    K = 3
    E = 2
    De = D * E

    key = jax.random.PRNGKey(0)
    k_x, k_we, k_be, k_wconv, k_bconv, k_wc, k_bc = jax.random.split(key, 7)

    x = jax.random.normal(k_x, (B, L, D), dtype=jnp.float32)

    # Deterministic parameter init (shapes match the nn.Module's __init__).
    params = {
        # nn.Linear(d_model, d_model*E): torch weight (De, D) -> stored transposed (D, De)
        "we": jax.random.normal(k_we, (D, De), dtype=jnp.float32) * 0.1,
        "be": jax.random.normal(k_be, (1, De), dtype=jnp.float32) * 0.1,
        # nn.Conv1d depthwise: torch weight (De, 1, K) -> stored as (K, De)
        "wconv": jax.random.normal(k_wconv, (K, De), dtype=jnp.float32) * 0.3,
        "bconv": jax.random.normal(k_bconv, (1, De), dtype=jnp.float32) * 0.1,
        # nn.Linear(d_model*E, d_model): torch weight (D, De) -> stored transposed (De, D)
        "wc": jax.random.normal(k_wc, (De, D), dtype=jnp.float32) * 0.1,
        "bc": jax.random.normal(k_bc, (1, D), dtype=jnp.float32) * 0.1,
    }

    ref = reference_forward(x, params, kernel_size=K)

    # seq_tile=8 forces two sequence tiles so the cross-tile K-1 halo carry is exercised.
    out = short_convolution(x, params, kernel_size=K, seq_tile=8)
    out = jax.block_until_ready(out)
    assert out.shape == (B, L, D)
    # bf16 matmul inputs (f32 accumulation) vs f32 reference -> relaxed tolerance
    assert jnp.allclose(out, ref, atol=3e-2, rtol=3e-2), "mismatch vs reference (seq_tile=8)"

    # Auto-selected sequence tile (VMEM-budget driven) -> single tile here.
    out2 = jax.block_until_ready(short_convolution(x, params, kernel_size=K))
    assert jnp.allclose(out2, ref, atol=3e-2, rtol=3e-2), "mismatch vs reference (auto tile)"

    print("KERNEL_OK")
</pallas_src>

<mosaic_0001>
module attributes {stable_mosaic.version = 11 : i64} {
  func.func @_short_conv_kernel(%arg0: i32, %arg1: i32, %arg2: memref<1x8x32xf32, #tpu.memory_space<vmem>>, %arg3: memref<32x128xbf16, #tpu.memory_space<vmem>>, %arg4: memref<1x128xf32, #tpu.memory_space<vmem>>, %arg5: memref<3x128xf32, #tpu.memory_space<vmem>>, %arg6: memref<1x128xf32, #tpu.memory_space<vmem>>, %arg7: memref<128x32xbf16, #tpu.memory_space<vmem>>, %arg8: memref<1x32xf32, #tpu.memory_space<vmem>>, %arg9: memref<1x8x32xf32, #tpu.memory_space<vmem>>, %arg10: memref<16x128xf32, #tpu.memory_space<vmem>>) attributes {dimension_semantics = [#tpu.dimension_semantics<parallel>, #tpu.dimension_semantics<arbitrary>], iteration_bounds = array<i64: 2, 2>, scalar_prefetch = 0 : i64, scratch_operands = 1 : i64, tpu.core_type = #tpu.core_type<tc>, window_params = [{transform_indices = @transform_0, window_bounds = array<i64: 1, 8, 32>}, {pipeline_mode = #tpu.pipeline_mode<synchronous>, transform_indices = @transform_1, window_bounds = array<i64: 32, 128>}, {pipeline_mode = #tpu.pipeline_mode<synchronous>, transform_indices = @transform_2, window_bounds = array<i64: 1, 128>}, {pipeline_mode = #tpu.pipeline_mode<synchronous>, transform_indices = @transform_3, window_bounds = array<i64: 3, 128>}, {pipeline_mode = #tpu.pipeline_mode<synchronous>, transform_indices = @transform_4, window_bounds = array<i64: 1, 128>}, {pipeline_mode = #tpu.pipeline_mode<synchronous>, transform_indices = @transform_5, window_bounds = array<i64: 128, 32>}, {pipeline_mode = #tpu.pipeline_mode<synchronous>, transform_indices = @transform_6, window_bounds = array<i64: 1, 32>}, {transform_indices = @transform_7, window_bounds = array<i64: 1, 8, 32>}]} {
    %c0_i32 = arith.constant 0 : i32
    %0 = arith.cmpi eq, %arg1, %c0_i32 : i32
    %1 = arith.extui %0 : i1 to i32
    %c0_i32_0 = arith.constant 0 : i32
    %2 = arith.cmpi ne, %1, %c0_i32_0 : i32
    scf.if %2 {
      %cst_24 = arith.constant 0.000000e+00 : f32
      %40 = vector.broadcast %cst_24 : f32 to vector<8x128xf32>
      %c0_25 = arith.constant 0 : index
      %c0_26 = arith.constant 0 : index
      %41 = vector.load %arg10[%c0_25, %c0_26] : memref<16x128xf32, #tpu.memory_space<vmem>>, vector<8x128xf32>
      tpu.vector_store %arg10[%c0_25, %c0_26], %40 {strides = array<i32>} : memref<16x128xf32, #tpu.memory_space<vmem>>, vector<8x128xf32>,
    } else {
    }
    %c0 = arith.constant 0 : index
    %c0_1 = arith.constant 0 : index
    %c0_2 = arith.constant 0 : index
    %3 = vector.load %arg2[%c0, %c0_1, %c0_2] : memref<1x8x32xf32, #tpu.memory_space<vmem>>, vector<1x8x32xf32>
    %4 = vector.shape_cast %3 : vector<1x8x32xf32> to vector<8x32xf32>
    %5 = arith.truncf %4 : vector<8x32xf32> to vector<8x32xbf16>
    %c0_3 = arith.constant 0 : index
    %c0_4 = arith.constant 0 : index
    %6 = vector.load %arg3[%c0_3, %c0_4] : memref<32x128xbf16, #tpu.memory_space<vmem>>, vector<32x128xbf16>
    %cst = arith.constant dense<0.000000e+00> : vector<8x128xf32>
    %7 = tpu.matmul %5, %6, %cst {dimension_numbers = #tpu.dot_dimension_numbers<[1], [0], [0], [1], [0, 0, 1, 1], [], []>} : vector<8x32xbf16>, vector<32x128xbf16>, vector<8x128xf32> -> vector<8x128xf32>
    %c0_5 = arith.constant 0 : index
    %c0_6 = arith.constant 0 : index
    %8 = vector.load %arg4[%c0_5, %c0_6] : memref<1x128xf32, #tpu.memory_space<vmem>>, vector<1x128xf32>
    %9 = vector.broadcast %8 : vector<1x128xf32> to vector<8x128xf32>
    %10 = arith.addf %7, %9 : vector<8x128xf32>
    %c0_7 = arith.constant 0 : index
    %c0_8 = arith.constant 0 : index
    %11 = vector.load %arg5[%c0_7, %c0_8] : memref<3x128xf32, #tpu.memory_space<vmem>>, vector<3x128xf32>
    %12 = vector.extract_strided_slice %11 {offsets = [2, 0], sizes = [1, 128], strides = [1, 1]} : vector<3x128xf32> to vector<1x128xf32>
    %13 = vector.broadcast %12 : vector<1x128xf32> to vector<8x128xf32>
    %14 = arith.mulf %10, %13 : vector<8x128xf32>
    %c0_9 = arith.constant 0 : index
    %c0_10 = arith.constant 0 : index
    %15 = vector.load %arg6[%c0_9, %c0_10] : memref<1x128xf32, #tpu.memory_space<vmem>>, vector<1x128xf32>
    %16 = vector.broadcast %15 : vector<1x128xf32> to vector<8x128xf32>
    %17 = arith.addf %14, %16 : vector<8x128xf32>
    %c8 = arith.constant 8 : index
    %c0_11 = arith.constant 0 : index
    %18 = vector.load %arg10[%c8, %c0_11] : memref<16x128xf32, #tpu.memory_space<vmem>>, vector<8x128xf32>
    tpu.vector_store %arg10[%c8, %c0_11], %10 {strides = array<i32>} : memref<16x128xf32, #tpu.memory_space<vmem>>, vector<8x128xf32>,
    %c6 = arith.constant 6 : index
    %c0_12 = arith.constant 0 : index
    %19 = vector.load %arg10[%c6, %c0_12] : memref<16x128xf32, #tpu.memory_space<vmem>>, vector<8x128xf32>
    %20 = vector.extract_strided_slice %11 {offsets = [0, 0], sizes = [1, 128], strides = [1, 1]} : vector<3x128xf32> to vector<1x128xf32>
    %21 = vector.broadcast %20 : vector<1x128xf32> to vector<8x128xf32>
    %22 = arith.mulf %19, %21 : vector<8x128xf32>
    %23 = arith.addf %17, %22 : vector<8x128xf32>
    %c7 = arith.constant 7 : index
    %c0_13 = arith.constant 0 : index
    %24 = vector.load %arg10[%c7, %c0_13] : memref<16x128xf32, #tpu.memory_space<vmem>>, vector<8x128xf32>
    %25 = vector.extract_strided_slice %11 {offsets = [1, 0], sizes = [1, 128], strides = [1, 1]} : vector<3x128xf32> to vector<1x128xf32>
    %26 = vector.broadcast %25 : vector<1x128xf32> to vector<8x128xf32>
    %27 = arith.mulf %24, %26 : vector<8x128xf32>
    %28 = arith.addf %23, %27 : vector<8x128xf32>
    %29 = vector.extract_strided_slice %10 {offsets = [6, 0], sizes = [2, 128], strides = [1, 1]} : vector<8x128xf32> to vector<2x128xf32>
    %c6_14 = arith.constant 6 : index
    %c0_15 = arith.constant 0 : index
    %30 = vector.load %arg10[%c6_14, %c0_15] : memref<16x128xf32, #tpu.memory_space<vmem>>, vector<2x128xf32>
    tpu.vector_store %arg10[%c6_14, %c0_15], %29 {strides = array<i32>} : memref<16x128xf32, #tpu.memory_space<vmem>>, vector<2x128xf32>,
    %31 = arith.truncf %28 : vector<8x128xf32> to vector<8x128xbf16>
    %c0_16 = arith.constant 0 : index
    %c0_17 = arith.constant 0 : index
    %32 = vector.load %arg7[%c0_16, %c0_17] : memref<128x32xbf16, #tpu.memory_space<vmem>>, vector<128x32xbf16>
    %cst_18 = arith.constant dense<0.000000e+00> : vector<8x32xf32>
    %33 = tpu.matmul %31, %32, %cst_18 {dimension_numbers = #tpu.dot_dimension_numbers<[1], [0], [0], [1], [0, 0, 1, 1], [], []>} : vector<8x128xbf16>, vector<128x32xbf16>, vector<8x32xf32> -> vector<8x32xf32>
    %c0_19 = arith.constant 0 : index
    %c0_20 = arith.constant 0 : index
    %34 = vector.load %arg8[%c0_19, %c0_20] : memref<1x32xf32, #tpu.memory_space<vmem>>, vector<1x32xf32>
    %35 = vector.broadcast %34 : vector<1x32xf32> to vector<8x32xf32>
    %36 = arith.addf %33, %35 : vector<8x32xf32>
    %c0_21 = arith.constant 0 : index
    %c0_22 = arith.constant 0 : index
    %c0_23 = arith.constant 0 : index
    %37 = vector.load %arg9[%c0_21, %c0_22, %c0_23] : memref<1x8x32xf32, #tpu.memory_space<vmem>>, vector<1x8x32xf32>
    %38 = vector.shape_cast %37 : vector<1x8x32xf32> to vector<8x32xf32>
    %39 = vector.shape_cast %36 : vector<8x32xf32> to vector<1x8x32xf32>
    tpu.vector_store %arg9[%c0_21, %c0_22, %c0_23], %39 {strides = array<i32>} : memref<1x8x32xf32, #tpu.memory_space<vmem>>, vector<1x8x32xf32>,
    return
  }
  func.func @transform_0(%arg0: i32, %arg1: i32) -> (i32, i32, i32) {
    %c0_i32 = arith.constant 0 : i32
    %c0_i32_0 = arith.constant 0 : i32
    return %arg0, %arg1, %c0_i32 : i32, i32, i32
  }
  func.func @transform_1(%arg0: i32, %arg1: i32) -> (i32, i32) {
    %c0_i32 = arith.constant 0 : i32
    %c0_i32_0 = arith.constant 0 : i32
    %c0_i32_1 = arith.constant 0 : i32
    return %c0_i32, %c0_i32_0 : i32, i32
  }
  func.func @transform_2(%arg0: i32, %arg1: i32) -> (i32, i32) {
    %c0_i32 = arith.constant 0 : i32
    %c0_i32_0 = arith.constant 0 : i32
    %c0_i32_1 = arith.constant 0 : i32
    return %c0_i32, %c0_i32_0 : i32, i32
  }
  func.func @transform_3(%arg0: i32, %arg1: i32) -> (i32, i32) {
    %c0_i32 = arith.constant 0 : i32
    %c0_i32_0 = arith.constant 0 : i32
    %c0_i32_1 = arith.constant 0 : i32
    return %c0_i32, %c0_i32_0 : i32, i32
  }
  func.func @transform_4(%arg0: i32, %arg1: i32) -> (i32, i32) {
    %c0_i32 = arith.constant 0 : i32
    %c0_i32_0 = arith.constant 0 : i32
    %c0_i32_1 = arith.constant 0 : i32
    return %c0_i32, %c0_i32_0 : i32, i32
  }
  func.func @transform_5(%arg0: i32, %arg1: i32) -> (i32, i32) {
    %c0_i32 = arith.constant 0 : i32
    %c0_i32_0 = arith.constant 0 : i32
    %c0_i32_1 = arith.constant 0 : i32
    return %c0_i32, %c0_i32_0 : i32, i32
  }
  func.func @transform_6(%arg0: i32, %arg1: i32) -> (i32, i32) {
    %c0_i32 = arith.constant 0 : i32
    %c0_i32_0 = arith.constant 0 : i32
    %c0_i32_1 = arith.constant 0 : i32
    return %c0_i32, %c0_i32_0 : i32, i32
  }
  func.func @transform_7(%arg0: i32, %arg1: i32) -> (i32, i32, i32) {
    %c0_i32 = arith.constant 0 : i32
    %c0_i32_0 = arith.constant 0 : i32
    return %arg0, %arg1, %c0_i32 : i32, i32, i32
  }
}

</mosaic_0001>

<llo_original>
// kernel: tpu_custom_call.1
$region0: #{tpu_custom_call.1}
  #allocation0 [shape = 'u32[]', space=smem, size = 0x4, offset = 0x4, fixed_abs, tag = 'smem constant byte address 0x4 - core index']
  #allocation1 [shape = 'u32[144,128]{1,0:T(1,128)}', space=vmem, size = 0x12000, scoped, tag = 'internal scratch']
  #allocation2 [shape = 'f32[16,128]{1,0:T(8,128)}', space=vmem, size = 0x2000, scoped, tag = 'scratch operand']
  %s0 = inlined_call_operand.vmem [shape: f32[2,16,32], index: 0, kind: input, shape index: {}]
  %s1 = inlined_call_operand.vmem [shape: bf16[32,128], index: 1, kind: input, shape index: {}]
  %s2 = inlined_call_operand.vmem [shape: f32[1,128], index: 2, kind: input, shape index: {}]
  %s3 = inlined_call_operand.vmem [shape: f32[3,128], index: 3, kind: input, shape index: {}]
  %s4 = inlined_call_operand.vmem [shape: f32[1,128], index: 4, kind: input, shape index: {}]
  %s5 = inlined_call_operand.vmem [shape: bf16[128,32], index: 5, kind: input, shape index: {}]
  %s6 = inlined_call_operand.vmem [shape: f32[1,32], index: 6, kind: input, shape index: {}]
  %s7 = inlined_call_operand.hbm [shape: f32[2,16,32], index: 7, kind: output, shape index: {}]
  %s8 = sld [smem:[#allocation0]]
  $region65: #{tpu_custom_call.1} parent=0
    _
  %s10 = ssub.s32 1, %s8
  %s11 = scalar_select 0, %s10, %s8
  $region1: #{tpu_custom_call.1} parent=0
    #allocation3 [shape = 'u8[8192]{0}', space=vmem, size = 0x2000, scoped, tag = 'output window, operand 0']
    #allocation4 [shape = 's32[2]{0}', space=sflag, size = 0x8, scoped, tag = 'scoped memory for tpu_custom_call.1']
    %12 = vsyncpa [#allocation4], 0
    %s13 = scalar_lea.sflag [#allocation4], 1
    %14 = vsyncpa %s13, 0
    loop: start=0, step=1, limit=6
    $region2: #{tpu_custom_call.1} parent=1 // loop_pre_header
      _
    $region3: #{tpu_custom_call.1} parent=1 // loop_header
      %s16 = sphi 0, %s20
      %p17 = scmp.ge.s32.totalorder %s16, 6
      %s23 = sphi 0, %s35
      %s24 = sphi 0, %s31
      %s25 = sphi 0, %s23
      %s26 = sphi 0, %s24
      %s27 = sphi 0, %s25
      %s28 = sphi 0, %s26
      %s40 = sphi 0, %s42
      %s43 = sphi 0, %s40
      %s44 = sphi 0, %s43
      %s60 = sphi 0, %s44
      %s64 = sphi 0, %s64
      %s66 = sphi 0, %s64
      %s67 = sphi 0, %s66
      %s81 = sphi 0, %s67
      %s85 = sphi 0, %s85
      %s87 = sphi 0, %s85
      %s88 = sphi 0, %s87
      %s102 = sphi 0, %s88
      %s106 = sphi 0, %s106
      %s108 = sphi 0, %s106
      %s109 = sphi 0, %s108
      %s123 = sphi 0, %s109
      %s127 = sphi 0, %s127
      %s129 = sphi 0, %s127
      %s130 = sphi 0, %s129
      %s144 = sphi 0, %s130
      %s148 = sphi 0, %s148
      %s150 = sphi 0, %s148
      %s151 = sphi 0, %s150
      %s165 = sphi 0, %s151
      %s169 = sphi 0, %s169
      %s171 = sphi 0, %s169
      %s172 = sphi 0, %s171
      %s186 = sphi 0, %s172
      %s194 = sphi 0, %s196
      %s197 = sphi 0, %s194
      %s198 = sphi 0, %s197
      %s214 = sphi 0, %s198
    $region4: #{tpu_custom_call.1} parent=1 // loop_header_branch
      %19 = sbr.rel (%p17) target = $region8
    $region5: #{tpu_custom_call.1} parent=1 // loop_body
      %s21 = ssub.s32 %s16, 1
      %s22 = ssub.s32 %s16, 2
      %s29 = sadd.s32 1, %s24
      %p30 = scmp.ge.s32.totalorder %s29, 2
      %s31 = scalar_select %p30, 0, %s29
      %s32 = sadd.s32 1, %s23
      %s33 = scalar_select %p30, %s32, %s23
      %p34 = scmp.ge.s32.totalorder %s33, 2
      %s35 = scalar_select %p34, 0, %s33
      %s36 = ssub.s32 %s23, %s35
      %s37 = ssub.s32 %s24, %s31
      %s38 = sor.u32 %s36, %s37
      %p39 = scmp.eq.s32.totalorder %s38, 0
      %s41 = sadd.s32 %s40, 1
      %s42 = scalar_select %p39, %s40, %s41
      %p45 = pneg %p39
      %p46 = scmp.eq.s32.totalorder %s16, 3
      %p47 = por %p45, %p46
      %p48 = scmp.ne.s32.totalorder %s40, %s43
      %p49 = scmp.eq.s32.totalorder %s16, 0
      %p50 = por %p48, %p49
      %p51 = scmp.ne.s32.totalorder %s40, %s43
      %p52 = scmp.eq.s32.totalorder %s21, 3
      %p53 = por %p51, %p52
      %p54 = scmp.ne.s32.totalorder %s43, %s44
      %p55 = scmp.eq.s32.totalorder %s21, 0
      %p56 = por %p54, %p55
      %p57 = scmp.ne.s32.totalorder %s43, %s44
      %p58 = scmp.eq.s32.totalorder %s22, 3
      %p59 = por %p57, %p58
      %p61 = scmp.ne.s32.totalorder %s44, %s60
      %p62 = scmp.eq.s32.totalorder %s22, 0
      %p63 = por %p61, %p62
      %s65 = sadd.s32 %s64, 1
      %p68 = scmp.eq.s32.totalorder %s16, 3
      %p69 = scmp.ne.s32.totalorder %s64, %s66
      %p70 = scmp.eq.s32.totalorder %s16, 0
      %p71 = por %p69, %p70
      %p72 = scmp.ne.s32.totalorder %s64, %s66
      %p73 = scmp.eq.s32.totalorder %s21, 3
      %p74 = por %p72, %p73
      %p75 = scmp.ne.s32.totalorder %s66, %s67
      %p76 = scmp.eq.s32.totalorder %s21, 0
      %p77 = por %p75, %p76
      %p78 = scmp.ne.s32.totalorder %s66, %s67
      %p79 = scmp.eq.s32.totalorder %s22, 3
      %p80 = por %p78, %p79
      %p82 = scmp.ne.s32.totalorder %s67, %s81
      %p83 = scmp.eq.s32.totalorder %s22, 0
      %p84 = por %p82, %p83
      %s86 = sadd.s32 %s85, 1
      %p89 = scmp.eq.s32.totalorder %s16, 3
      %p90 = scmp.ne.s32.totalorder %s85, %s87
      %p91 = scmp.eq.s32.totalorder %s16, 0
      %p92 = por %p90, %p91
      %p93 = scmp.ne.s32.totalorder %s85, %s87
      %p94 = scmp.eq.s32.totalorder %s21, 3
      %p95 = por %p93, %p94
      %p96 = scmp.ne.s32.totalorder %s87, %s88
      %p97 = scmp.eq.s32.totalorder %s21, 0
      %p98 = por %p96, %p97
      %p99 = scmp.ne.s32.totalorder %s87, %s88
      %p100 = scmp.eq.s32.totalorder %s22, 3
      %p101 = por %p99, %p100
      %p103 = scmp.ne.s32.totalorder %s88, %s102
      %p104 = scmp.eq.s32.totalorder %s22, 0
      %p105 = por %p103, %p104
      %s107 = sadd.s32 %s106, 1
      %p110 = scmp.eq.s32.totalorder %s16, 3
      %p111 = scmp.ne.s32.totalorder %s106, %s108
      %p112 = scmp.eq.s32.totalorder %s16, 0
      %p113 = por %p111, %p112
      %p114 = scmp.ne.s32.totalorder %s106, %s108
      %p115 = scmp.eq.s32.totalorder %s21, 3
      %p116 = por %p114, %p115
      %p117 = scmp.ne.s32.totalorder %s108, %s109
      %p118 = scmp.eq.s32.totalorder %s21, 0
      %p119 = por %p117, %p118
      %p120 = scmp.ne.s32.totalorder %s108, %s109
      %p121 = scmp.eq.s32.totalorder %s22, 3
      %p122 = por %p120, %p121
      %p124 = scmp.ne.s32.totalorder %s109, %s123
      %p125 = scmp.eq.s32.totalorder %s22, 0
      %p126 = por %p124, %p125
      %s128 = sadd.s32 %s127, 1
      %p131 = scmp.eq.s32.totalorder %s16, 3
      %p132 = scmp.ne.s32.totalorder %s127, %s129
      %p133 = scmp.eq.s32.totalorder %s16, 0
      %p134 = por %p132, %p133
      %p135 = scmp.ne.s32.totalorder %s127, %s129
      %p136 = scmp.eq.s32.totalorder %s21, 3
      %p137 = por %p135, %p136
      %p138 = scmp.ne.s32.totalorder %s129, %s130
      %p139 = scmp.eq.s32.totalorder %s21, 0
      %p140 = por %p138, %p139
      %p141 = scmp.ne.s32.totalorder %s129, %s130
      %p142 = scmp.eq.s32.totalorder %s22, 3
      %p143 = por %p141, %p142
      %p145 = scmp.ne.s32.totalorder %s130, %s144
      %p146 = scmp.eq.s32.totalorder %s22, 0
      %p147 = por %p145, %p146
      %s149 = sadd.s32 %s148, 1
      %p152 = scmp.eq.s32.totalorder %s16, 3
      %p153 = scmp.ne.s32.totalorder %s148, %s150
      %p154 = scmp.eq.s32.totalorder %s16, 0
      %p155 = por %p153, %p154
      %p156 = scmp.ne.s32.totalorder %s148, %s150
      %p157 = scmp.eq.s32.totalorder %s21, 3
      %p158 = por %p156, %p157
      %p159 = scmp.ne.s32.totalorder %s150, %s151
      %p160 = scmp.eq.s32.totalorder %s21, 0
      %p161 = por %p159, %p160
      %p162 = scmp.ne.s32.totalorder %s150, %s151
      %p163 = scmp.eq.s32.totalorder %s22, 3
      %p164 = por %p162, %p163
      %p166 = scmp.ne.s32.totalorder %s151, %s165
      %p167 = scmp.eq.s32.totalorder %s22, 0
      %p168 = por %p166, %p167
      %s170 = sadd.s32 %s169, 1
      %p173 = scmp.eq.s32.totalorder %s16, 3
      %p174 = scmp.ne.s32.totalorder %s169, %s171
      %p175 = scmp.eq.s32.totalorder %s16, 0
      %p176 = por %p174, %p175
      %p177 = scmp.ne.s32.totalorder %s169, %s171
      %p178 = scmp.eq.s32.totalorder %s21, 3
      %p179 = por %p177, %p178
      %p180 = scmp.ne.s32.totalorder %s171, %s172
      %p181 = scmp.eq.s32.totalorder %s21, 0
      %p182 = por %p180, %p181
      %p183 = scmp.ne.s32.totalorder %s171, %s172
      %p184 = scmp.eq.s32.totalorder %s22, 3
      %p185 = por %p183, %p184
      %p187 = scmp.ne.s32.totalorder %s172, %s186
      %p188 = scmp.eq.s32.totalorder %s22, 0
      %p189 = por %p187, %p188
      %s190 = ssub.s32 %s23, %s35
      %s191 = ssub.s32 %s24, %s31
      %s192 = sor.u32 %s190, %s191
      %p193 = scmp.eq.s32.totalorder %s192, 0
      %s195 = sadd.s32 %s194, 1
      %s196 = scalar_select %p193, %s194, %s195
      %p199 = pneg %p193
      %p200 = scmp.eq.s32.totalorder %s16, 3
      %p201 = por %p199, %p200
      %p202 = scmp.ne.s32.totalorder %s194, %s197
      %p203 = scmp.eq.s32.totalorder %s16, 0
      %p204 = por %p202, %p203
      %p205 = scmp.ne.s32.totalorder %s194, %s197
      %p206 = scmp.eq.s32.totalorder %s21, 3
      %p207 = por %p205, %p206
      %p208 = scmp.ne.s32.totalorder %s197, %s198
      %p209 = scmp.eq.s32.totalorder %s21, 0
      %p210 = por %p208, %p209
      %p211 = scmp.ne.s32.totalorder %s197, %s198
      %p212 = scmp.eq.s32.totalorder %s22, 3
      %p213 = por %p211, %p212
      %p215 = scmp.ne.s32.totalorder %s198, %s214
      %p216 = scmp.eq.s32.totalorder %s22, 0
      %p217 = por %p215, %p216
      %p218 = scmp.le.s32.totalorder 1, %s16
      %p219 = scmp.lt.s32.totalorder %s16, 5
      %p220 = pnand %p218, %p219
      %p221 = pneg %p220
      // Predicated region
      $region9: #{tpu_custom_call.1} parent=5 // pred_check
        _
      $region10: #{tpu_custom_call.1} parent=5 // pred_check_branch
        %223 = sbr.rel (%p220) target = $region12
      $region11: #{tpu_custom_call.1} parent=5 // pred_region
        %s224 = ssub.s32 %s16, 1
        // Predicated region
        $region13: #{tpu_custom_call.1} parent=11 // pred_check
          %p225 = pneg %p77
        $region14: #{tpu_custom_call.1} parent=11 // pred_check_branch
          %227 = sbr.rel (%p225) target = $region16
        $region15: #{tpu_custom_call.1} parent=11 // pred_region
          _
        $region16: #{tpu_custom_call.1} parent=11 // pred_fallthru
          _
        // Predicated region
        $region17: #{tpu_custom_call.1} parent=11 // pred_check
          %p228 = pneg %p98
        $region18: #{tpu_custom_call.1} parent=11 // pred_check_branch
          %230 = sbr.rel (%p228) target = $region20
        $region19: #{tpu_custom_call.1} parent=11 // pred_region
          _
        $region20: #{tpu_custom_call.1} parent=11 // pred_fallthru
          _
        // Predicated region
        $region21: #{tpu_custom_call.1} parent=11 // pred_check
          %p231 = pneg %p119
        $region22: #{tpu_custom_call.1} parent=11 // pred_check_branch
          %233 = sbr.rel (%p231) target = $region24
        $region23: #{tpu_custom_call.1} parent=11 // pred_region
          _
        $region24: #{tpu_custom_call.1} parent=11 // pred_fallthru
          _
        // Predicated region
        $region25: #{tpu_custom_call.1} parent=11 // pred_check
          %p234 = pneg %p140
        $region26: #{tpu_custom_call.1} parent=11 // pred_check_branch
          %236 = sbr.rel (%p234) target = $region28
        $region27: #{tpu_custom_call.1} parent=11 // pred_region
          _
        $region28: #{tpu_custom_call.1} parent=11 // pred_fallthru
          _
        // Predicated region
        $region29: #{tpu_custom_call.1} parent=11 // pred_check
          %p237 = pneg %p161
        $region30: #{tpu_custom_call.1} parent=11 // pred_check_branch
          %239 = sbr.rel (%p237) target = $region32
        $region31: #{tpu_custom_call.1} parent=11 // pred_region
          _
        $region32: #{tpu_custom_call.1} parent=11 // pred_fallthru
          _
        // Predicated region
        $region33: #{tpu_custom_call.1} parent=11 // pred_check
          %p240 = pneg %p182
        $region34: #{tpu_custom_call.1} parent=11 // pred_check_branch
          %242 = sbr.rel (%p240) target = $region36
        $region35: #{tpu_custom_call.1} parent=11 // pred_region
          _
        $region36: #{tpu_custom_call.1} parent=11 // pred_fallthru
          _
      $region12: #{tpu_custom_call.1} parent=5 // pred_fallthru
        _
      %p243 = scmp.lt.s32.totalorder %s16, 4
      // Predicated region
      $region37: #{tpu_custom_call.1} parent=5 // pred_check
        %p244 = pneg %p243
      $region38: #{tpu_custom_call.1} parent=5 // pred_check_branch
        %246 = sbr.rel (%p244) target = $region40
      $region39: #{tpu_custom_call.1} parent=5 // pred_region
        // Predicated region
        $region41: #{tpu_custom_call.1} parent=39 // pred_check
          %p247 = pneg %p50
        $region42: #{tpu_custom_call.1} parent=39 // pred_check_branch
          %249 = sbr.rel (%p247) target = $region44
        $region43: #{tpu_custom_call.1} parent=39 // pred_region
          %p250 = scmp.lt.s32.totalorder %s23, 1
          %s251 = scalar_select %p250, %s23, 1
          %p252 = scmp.lt.s32.totalorder %s24, 1
          %s253 = scalar_select %p252, %s24, 1
          %s254 = smul.addr %s251, 2
          %s255 = sadd.s32 %s253, %s254
          %s256 = smul.addr %s255, 8
          %s257 = scalar_lea.vmem %s0, %s256
        $region44: #{tpu_custom_call.1} parent=39 // pred_fallthru
          _
      $region40: #{tpu_custom_call.1} parent=5 // pred_fallthru
        _
      %p258 = scmp.le.s32.totalorder 1, %s16
      %p259 = scmp.lt.s32.totalorder %s16, 5
      %p260 = pnand %p258, %p259
      %p261 = pneg %p260
      // Predicated region
      $region45: #{tpu_custom_call.1} parent=5 // pred_check
        _
      $region46: #{tpu_custom_call.1} parent=5 // pred_check_branch
        %263 = sbr.rel (%p260) target = $region48
      $region47: #{tpu_custom_call.1} parent=5 // pred_region
        %s264 = ssub.s32 %s16, 1
        %p265 = scmp.lt.s32.totalorder %s25, 1
        %s266 = scalar_select %p265, %s25, 1
        %p267 = scmp.lt.s32.totalorder %s26, 1
        %s268 = scalar_select %p267, %s26, 1
        %s269 = smul.addr %s266, 2
        %s270 = sadd.s32 %s268, %s269
        %s271 = smul.addr %s270, 8
        %s272 = scalar_lea.vmem %s0, %s271
        %p273 = pneg %p56
        %p274 = pneg %p53
        %p275 = pneg %p77
        %p276 = pneg %p74
        %p277 = pneg %p98
        %p278 = pneg %p95
        %p279 = pneg %p119
        %p280 = pneg %p116
        %p281 = pneg %p140
        %p282 = pneg %p137
        %p283 = pneg %p161
        %p284 = pneg %p158
        %p285 = pneg %p182
        %p286 = pneg %p179
        %p287 = pneg %p210
        %p288 = pneg %p207
        %s289 = sand.u32 %s197, 1
        %s290 = scalar_lea.sflag [#allocation4], %s289
        %s291 = sand.u32 %s197, 1
        %s292 = smul.addr %s291, 8
        %s293 = scalar_lea.vmem [#allocation3], %s292
        %p294 = scmp.lt.s32.totalorder %s25, 1
        %s295 = scalar_select %p294, %s25, 1
        %p296 = scmp.lt.s32.totalorder %s26, 1
        %s297 = scalar_select %p296, %s26, 1
        %s298 = smul.addr %s295, 2
        %s299 = sadd.s32 %s297, %s298
        %s300 = smul.addr %s299, 8
        %s301 = scalar_lea.vmem %s0, %s300
        %p303 = scmp.eq.s32.totalorder %s26, 0
        // Predicated region
        $region49: #{tpu_custom_call.1} parent=47 // pred_check
          %p304 = pneg %p303
        $region50: #{tpu_custom_call.1} parent=47 // pred_check_branch
          %306 = sbr.rel (%p304) target = $region52
        $region51: #{tpu_custom_call.1} parent=47 // pred_region
          %307 = vst [vmem:[#allocation2] sm:$0xff] 0.0
        $region52: #{tpu_custom_call.1} parent=47 // pred_fallthru
          _
        %v308 = vld [vmem:[%s301] sm:$0xff]
        %v309 = vpack.c.bf16 %v308, %v308
        %v310 = vld [vmem:[%s1] sm:$0xf]
        %v311 = vld [vmem:[%s1 + $0x4] sm:$0xf]
        %v312 = vld [vmem:[%s1 + $0x8] sm:$0xf]
        %v313 = vld [vmem:[%s1 + $0xc] sm:$0xf]
        %v314 = vld [vmem:[%s2] sm:$0x1]
        %v316 = vlaneseq
        %v317 = vshrl.u32 %v316, 7
        %v318 = vsub.s32 0, %v317
        %v319 = vrot.slane %v314, %v318
        %v325 = vunpack.c.l.b16 %v310
        %v326 = vunpack.c.l.b16 %v311
        %v327 = vunpack.c.l.b16 %v312
        %v328 = vunpack.c.l.b16 %v313
        %v329 = vpack.c.b16 %v326, %v325
        %v330 = vpack.c.b16 %v328, %v327
        %vm333 = vcmask 261120
        %v335 = vsel %vm333, %v309, 0
        %337 = vmatprep.subr.bf16.mxu0 0
        %338 = vmatpush1.bf16.msra.mxu0 %v329
        %339 = vmatprep.subr.bf16.mxu0 0
        %340 = vmatpush1.bf16.msra.mxu0 %v330
        %341 = vmatprep.subr.bf16.mxu0 0
        %342 = vmatpush1.bf16.msra.mxu0 0
        %343 = vmatprep.subr.bf16.mxu0 0
        %344 = vmatpush1.bf16.msra.mxu0 0
        %345 = vmatprep.subr.bf16.mxu0 0
        %346 = vmatpush1.bf16.msra.mxu0 0
        %347 = vmatprep.subr.bf16.mxu0 0
        %348 = vmatpush1.bf16.msra.mxu0 0
        %349 = vmatprep.subr.bf16.mxu0 0
        %350 = vmatpush1.bf16.msra.mxu0 0
        %351 = vmatprep.subr.bf16.mxu0 0
        %352 = vmatpush1.bf16.msra.mxu0 0
        %353 = vmatprep.subr.bf16.mxu0 0
        %354 = vmatpush1.bf16.msra.mxu0 0
        %355 = vmatprep.subr.bf16.mxu0 0
        %356 = vmatpush1.bf16.msra.mxu0 0
        %357 = vmatprep.subr.bf16.mxu0 0
        %358 = vmatpush1.bf16.msra.mxu0 0
        %359 = vmatprep.subr.bf16.mxu0 0
        %360 = vmatpush1.bf16.msra.mxu0 0
        %361 = vmatprep.subr.bf16.mxu0 0
        %362 = vmatpush1.bf16.msra.mxu0 0
        %363 = vmatprep.subr.bf16.mxu0 0
        %364 = vmatpush1.bf16.msra.mxu0 0
        %365 = vmatprep.subr.bf16.mxu0 0
        %366 = vmatpush1.bf16.msra.mxu0 0
        %367 = vmatprep.subr.bf16.mxu0 0
        %368 = vmatpush1.bf16.msra.mxu0 0
        %369 = vmatprep.mubr.bf16.mxu0 0
        %370 = vmatmul.mubr.bf16.gmra.mrb[0].mxu0 %v335
        %v371 = vpop.f32.mrb[0].mxu0
        %v372 = vadd.f32 %v319, %v371
        %v373 = vpop.f32.mrb[0].mxu0
        %v374 = vpop.f32.mrb[0].mxu0
        %v375 = vpop.f32.mrb[0].mxu0
        %376 = vdwg.mxu0
        %v377 = vld [vmem:[%s3] sm:$0x7]
        %v378 = vlaneseq
        %v379 = vshrl.u32 %v378, 7
        %v380 = vsub.s32 2, %v379
        %v381 = vrot.slane %v377, %v380
        %v382 = vmul.f32 %v372, %v381
        %v383 = vld [vmem:[%s4] sm:$0x1]
        %v385 = vlaneseq
        %v386 = vshrl.u32 %v385, 7
        %v387 = vsub.s32 0, %v386
        %v388 = vrot.slane %v383, %v387
        %v390 = vadd.f32 %v382, %v388
        %391 = vst [vmem:[#allocation2 + $0x8] sm:$0xff] %v372
        %v392 = vld [vmem:[#allocation2 + $0x6] sm:$0xff]
        %v393 = vlaneseq
        %v394 = vshrl.u32 %v393, 7
        %v395 = vsub.s32 0, %v394
        %v396 = vrot.slane %v377, %v395
        %v397 = vmul.f32 %v392, %v396
        %v398 = vadd.f32 %v390, %v397
        %v399 = vld [vmem:[#allocation2 + $0x7] sm:$0xff]
        %v400 = vlaneseq
        %v401 = vshrl.u32 %v400, 7
        %v402 = vsub.s32 1, %v401
        %v403 = vrot.slane %v377, %v402
        %v404 = vmul.f32 %v399, %v403
        %v405 = vadd.f32 %v398, %v404
        %406 = vst [vmem:[#allocation2] sm:$0xc0] %v372
        %v407 = vpack.c.bf16 %v405, %v405
        %v408 = vld [vmem:[%s5] sm:$0xf]
        %v409 = vld [vmem:[%s5 + $0x4] sm:$0xf]
        %v410 = vld [vmem:[%s5 + $0x8] sm:$0xf]
        %v411 = vld [vmem:[%s5 + $0xc] sm:$0xf]
        %v412 = vld [vmem:[%s5 + $0x10] sm:$0xf]
        %v413 = vld [vmem:[%s5 + $0x14] sm:$0xf]
        %v414 = vld [vmem:[%s5 + $0x18] sm:$0xf]
        %v415 = vld [vmem:[%s5 + $0x1c] sm:$0xf]
        %v416 = vld [vmem:[%s5 + $0x20] sm:$0xf]
        %v417 = vld [vmem:[%s5 + $0x24] sm:$0xf]
        %v418 = vld [vmem:[%s5 + $0x28] sm:$0xf]
        %v419 = vld [vmem:[%s5 + $0x2c] sm:$0xf]
        %v420 = vld [vmem:[%s5 + $0x30] sm:$0xf]
        %v421 = vld [vmem:[%s5 + $0x34] sm:$0xf]
        %v422 = vld [vmem:[%s5 + $0x38] sm:$0xf]
        %v423 = vld [vmem:[%s5 + $0x3c] sm:$0xf]
        %v424 = vld [vmem:[%s6] sm:$0x1]
        %v426 = vlaneseq
        %v427 = vshrl.u32 %v426, 7
        %v428 = vsub.s32 0, %v427
        %v429 = vrot.slane %v424, %v428
        %v447 = vunpack.c.l.b16 %v408
        %v448 = vunpack.c.l.b16 %v409
        %v449 = vunpack.c.l.b16 %v410
        %v450 = vunpack.c.l.b16 %v411
        %v451 = vunpack.c.l.b16 %v412
        %v452 = vunpack.c.l.b16 %v413
        %v453 = vunpack.c.l.b16 %v414
        %v454 = vunpack.c.l.b16 %v415
        %v455 = vunpack.c.l.b16 %v416
        %v456 = vunpack.c.l.b16 %v417
        %v457 = vunpack.c.l.b16 %v418
        %v458 = vunpack.c.l.b16 %v419
        %v459 = vunpack.c.l.b16 %v420
        %v460 = vunpack.c.l.b16 %v421
        %v461 = vunpack.c.l.b16 %v422
        %v462 = vunpack.c.l.b16 %v423
        %v463 = vpack.c.b16 %v448, %v447
        %v464 = vpack.c.b16 %v450, %v449
        %v465 = vpack.c.b16 %v452, %v451
        %v466 = vpack.c.b16 %v454, %v453
        %v467 = vpack.c.b16 %v456, %v455
        %v468 = vpack.c.b16 %v458, %v457
        %v469 = vpack.c.b16 %v460, %v459
        %v470 = vpack.c.b16 %v462, %v461
        %479 = vmatprep.subr.bf16.mxu0 0
        %480 = vmatpush1.bf16.msra.mxu0 %v463
        %481 = vmatprep.subr.bf16.mxu0 0
        %482 = vmatpush1.bf16.msra.mxu0 %v464
        %483 = vmatprep.subr.bf16.mxu0 0
        %484 = vmatpush1.bf16.msra.mxu0 %v465
        %485 = vmatprep.subr.bf16.mxu0 0
        %486 = vmatpush1.bf16.msra.mxu0 %v466
        %487 = vmatprep.subr.bf16.mxu0 0
        %488 = vmatpush1.bf16.msra.mxu0 %v467
        %489 = vmatprep.subr.bf16.mxu0 0
        %490 = vmatpush1.bf16.msra.mxu0 %v468
        %491 = vmatprep.subr.bf16.mxu0 0
        %492 = vmatpush1.bf16.msra.mxu0 %v469
        %493 = vmatprep.subr.bf16.mxu0 0
        %494 = vmatpush1.bf16.msra.mxu0 %v470
        %495 = vmatprep.subr.bf16.mxu0 0
        %496 = vmatpush1.bf16.msra.mxu0 0
        %497 = vmatprep.subr.bf16.mxu0 0
        %498 = vmatpush1.bf16.msra.mxu0 0
        %499 = vmatprep.subr.bf16.mxu0 0
        %500 = vmatpush1.bf16.msra.mxu0 0
        %501 = vmatprep.subr.bf16.mxu0 0
        %502 = vmatpush1.bf16.msra.mxu0 0
        %503 = vmatprep.subr.bf16.mxu0 0
        %504 = vmatpush1.bf16.msra.mxu0 0
        %505 = vmatprep.subr.bf16.mxu0 0
        %506 = vmatpush1.bf16.msra.mxu0 0
        %507 = vmatprep.subr.bf16.mxu0 0
        %508 = vmatpush1.bf16.msra.mxu0 0
        %509 = vmatprep.subr.bf16.mxu0 0
        %510 = vmatpush1.bf16.msra.mxu0 0
        %511 = vmatprep.mubr.bf16.mxu0 0
        %512 = vmatmul.mubr.bf16.gmra.mrb[0].mxu0 %v407
        %v513 = vpop.f32.mrb[0].mxu0
        %v514 = vadd.f32 %v429, %v513
        %v515 = vpop.f32.mrb[0].mxu0
        %v516 = vpop.f32.mrb[0].mxu0
        %v517 = vpop.f32.mrb[0].mxu0
        %518 = vdwg.mxu0
        %519 = vst.msk [vmem:[%s293] sm:$0xff] %vm333, %v514
        %s520 = sand.u32 %s197, 1
        %s521 = scalar_lea.sflag [#allocation4], %s520
        %s522 = sand.u32 %s197, 1
        %s523 = smul.addr %s522, 8
        %s524 = scalar_lea.vmem [#allocation3], %s523
        // Predicated region
        $region53: #{tpu_custom_call.1} parent=47 // pred_check
          %p525 = pneg %p207
        $region54: #{tpu_custom_call.1} parent=47 // pred_check_branch
          %527 = sbr.rel (%p525) target = $region56
        $region55: #{tpu_custom_call.1} parent=47 // pred_region
          %s529 = ssub.s32 128, 128
          %530 = vsyncadd %s521, %s529
          %s531 = smul.addr %s25, 2
          %s532 = sadd.s32 %s26, %s531
          %s533 = smul.addr %s532, 128
          %s534 = scalar_lea.hbm %s7, %s533
          %s536 = sshll.u32 %s524, 4
          %s537 = int_to_ptr.vmem [resolvable:$true] %s536
          %539 = dma.vmem_to_hbm [thread:$0]  %s537, 128, %s534, %s521
        $region56: #{tpu_custom_call.1} parent=47 // pred_fallthru
          _
      $region48: #{tpu_custom_call.1} parent=5 // pred_fallthru
        _
      %p540 = scmp.le.s32.totalorder 2, %s16
      // Predicated region
      $region57: #{tpu_custom_call.1} parent=5 // pred_check
        %p541 = pneg %p540
      $region58: #{tpu_custom_call.1} parent=5 // pred_check_branch
        %543 = sbr.rel (%p541) target = $region60
      $region59: #{tpu_custom_call.1} parent=5 // pred_region
        %s544 = ssub.s32 %s16, 2
        // Predicated region
        $region61: #{tpu_custom_call.1} parent=59 // pred_check
          %p545 = pneg %p213
        $region62: #{tpu_custom_call.1} parent=59 // pred_check_branch
          %547 = sbr.rel (%p545) target = $region64
        $region63: #{tpu_custom_call.1} parent=59 // pred_region
          %s548 = sand.u32 %s198, 1
          %s549 = scalar_lea.sflag [#allocation4], %s548
          %s550 = sand.u32 %s198, 1
          %s551 = smul.addr %s550, 8
          %s552 = scalar_lea.vmem [#allocation3], %s551
          %553 = dma.done %s549, 128
        $region64: #{tpu_custom_call.1} parent=59 // pred_fallthru
          _
      $region60: #{tpu_custom_call.1} parent=5 // pred_fallthru
        _
    $region6: #{tpu_custom_call.1} parent=1 // loop_footer
      %s20 = sadd.s32 1, %s16
    $region7: #{tpu_custom_call.1} parent=1 // loop_footer_branch
      %15 = sbr.rel target = $region3
    $region8: #{tpu_custom_call.1} parent=1 // loop_exit
      _
    %554 = vsyncpa [#allocation4], 1
    %s555 = scalar_lea.sflag [#allocation4], 1
    %556 = vsyncpa %s555, 1

</llo_original>
